<compile_context>
chip_gen: v5e
topology: v5e:2x2
jax: 0.10.0
libtpu: 0.0.40
codegen_flags: <defaults>
</compile_context>

<pallas_src>
import functools

import jax
import jax.numpy as jnp
from jax.experimental import pallas as pl
from jax.experimental.pallas import tpu as pltpu


def _mex_kernel(x_ref, alpha_ref, o_ref, acc_ref, *, inv_s):
    # x_ref:     (TB, C, TS)  spatial tile of the flattened input
    # alpha_ref: (1, C)       per-channel alpha
    # o_ref:     (TB, C)      output (resident across the spatial grid axis)
    # acc_ref:   (TB, C)      VMEM accumulator: running sum of exp(alpha * x)
    s = pl.program_id(1)

    @pl.when(s == 0)
    def _():
        acc_ref[...] = jnp.zeros_like(acc_ref)

    x = x_ref[...]                       # (TB, C, TS)
    a = alpha_ref[...]                   # (1, C)
    # exp -> EUP, cross-lane sum -> XLU.
    acc_ref[...] += jnp.sum(jnp.exp(a[:, :, None] * x), axis=-1)

    @pl.when(s == pl.num_programs(1) - 1)
    def _():
        mean = acc_ref[...] * inv_s      # mean over the full spatial extent
        o_ref[...] = (jnp.log(mean) / a).astype(o_ref.dtype)


def _pick_spatial_tile(s, max_tile=2048):
    """Largest lane-aligned tile (multiple of 128) dividing S, capped for VMEM."""
    if s <= max_tile:
        return s
    for ts in range(max_tile, 127, -128):
        if s % ts == 0:
            return ts
    return s  # fallback: single full-extent block


def mex_forward(x, alpha):
    """x: (B, C, H, W) float32; alpha: (C,) float32  ->  (B, C) float32."""
    B, C, H, W = x.shape
    S = H * W
    x3 = x.reshape(B, C, S).astype(jnp.float32)      # matches input.view(...)
    a2 = alpha.reshape(1, C).astype(jnp.float32)

    TS = _pick_spatial_tile(S)
    TB = B                                            # whole batch per block (tiny here)
    grid = (B // TB, S // TS)

    kernel = functools.partial(_mex_kernel, inv_s=1.0 / float(S))

    return pl.pallas_call(
        kernel,
        grid=grid,
        out_shape=jax.ShapeDtypeStruct((B, C), jnp.float32),
        in_specs=[
            pl.BlockSpec((TB, C, TS), lambda b, s: (b, 0, s)),
            pl.BlockSpec((1, C), lambda b, s: (0, 0)),
        ],
        out_specs=pl.BlockSpec((TB, C), lambda b, s: (b, 0)),
        scratch_shapes=[pltpu.VMEM((TB, C), jnp.float32)],
        compiler_params=pltpu.CompilerParams(
            dimension_semantics=("parallel", "arbitrary")),
    )(x3, a2)


def mex_reference(x, alpha):
    """Pure-jnp reference matching the PyTorch forward exactly."""
    B, C, H, W = x.shape
    x3 = x.reshape(B, C, H * W)
    a = alpha.reshape(1, C, 1)
    m = jnp.mean(jnp.exp(a * x3), axis=2)
    return jnp.log(m) / alpha.reshape(1, C)


if __name__ == "__main__":
    key = jax.random.PRNGKey(0)
    B, C, H, W = 2, 41, 16, 16          # C = 41 is fixed by the module's alpha
    x = jax.random.normal(key, (B, C, H, W), jnp.float32)

    # Module init: alpha = ones(41)
    alpha_init = jnp.ones((C,), jnp.float32)
    out = jax.block_until_ready(jax.jit(mex_forward)(x, alpha_init))
    ref = mex_reference(x, alpha_init)
    assert out.shape == (B, C), out.shape
    assert bool(jnp.all(jnp.isfinite(out)))
    assert bool(jnp.allclose(out, ref, rtol=1e-4, atol=1e-4))

    # Non-uniform alpha exercises the per-channel broadcast path.
    alpha_var = jnp.linspace(0.5, 1.5, C, dtype=jnp.float32)
    out2 = jax.block_until_ready(jax.jit(mex_forward)(x, alpha_var))
    ref2 = mex_reference(x, alpha_var)
    assert bool(jnp.allclose(out2, ref2, rtol=1e-4, atol=1e-4))

    print("KERNEL_OK")
</pallas_src>

<mosaic_0001>
module attributes {stable_mosaic.version = 11 : i64} {
  func.func @_mex_kernel(%arg0: i32, %arg1: i32, %arg2: memref<2x41x256xf32, #tpu.memory_space<vmem>>, %arg3: memref<1x41xf32, #tpu.memory_space<vmem>>, %arg4: memref<2x41xf32, #tpu.memory_space<vmem>>, %arg5: memref<2x41xf32, #tpu.memory_space<vmem>>) attributes {dimension_semantics = [#tpu.dimension_semantics<parallel>, #tpu.dimension_semantics<arbitrary>], iteration_bounds = array<i64: 1, 1>, scalar_prefetch = 0 : i64, scratch_operands = 1 : i64, tpu.core_type = #tpu.core_type<tc>, window_params = [{transform_indices = @transform_0, window_bounds = array<i64: 2, 41, 256>}, {pipeline_mode = #tpu.pipeline_mode<synchronous>, transform_indices = @transform_1, window_bounds = array<i64: 1, 41>}, {transform_indices = @transform_2, window_bounds = array<i64: 2, 41>}]} {
    %c0_i32 = arith.constant 0 : i32
    %0 = arith.cmpi eq, %arg1, %c0_i32 : i32
    %1 = arith.extui %0 : i1 to i32
    %c0_i32_0 = arith.constant 0 : i32
    %2 = arith.cmpi ne, %1, %c0_i32_0 : i32
    scf.if %2 {
      %cst_11 = arith.constant 0.000000e+00 : f32
      %16 = vector.broadcast %cst_11 : f32 to vector<2x41xf32>
      %c0_12 = arith.constant 0 : index
      %c0_13 = arith.constant 0 : index
      %17 = vector.load %arg5[%c0_12, %c0_13] : memref<2x41xf32, #tpu.memory_space<vmem>>, vector<2x41xf32>
      tpu.vector_store %arg5[%c0_12, %c0_13], %16 {strides = array<i32>} : memref<2x41xf32, #tpu.memory_space<vmem>>, vector<2x41xf32>,
    } else {
    }
    %c0 = arith.constant 0 : index
    %c0_1 = arith.constant 0 : index
    %c0_2 = arith.constant 0 : index
    %3 = vector.load %arg2[%c0, %c0_1, %c0_2] : memref<2x41x256xf32, #tpu.memory_space<vmem>>, vector<2x41x256xf32>
    %c0_3 = arith.constant 0 : index
    %c0_4 = arith.constant 0 : index
    %4 = vector.load %arg3[%c0_3, %c0_4] : memref<1x41xf32, #tpu.memory_space<vmem>>, vector<1x41xf32>
    %c0_5 = arith.constant 0 : index
    %c0_6 = arith.constant 0 : index
    %5 = vector.load %arg5[%c0_5, %c0_6] : memref<2x41xf32, #tpu.memory_space<vmem>>, vector<2x41xf32>
    %6 = vector.shape_cast %4 : vector<1x41xf32> to vector<1x41x1xf32>
    %7 = vector.broadcast %6 : vector<1x41x1xf32> to vector<2x41x256xf32>
    %8 = arith.mulf %7, %3 : vector<2x41x256xf32>
    %9 = math.exp %8 : vector<2x41x256xf32>
    %cst = arith.constant dense<0.000000e+00> : vector<2x41xf32>
    %10 = vector.multi_reduction <add>, %9, %cst [2] : vector<2x41x256xf32> to vector<2x41xf32>
    %11 = arith.addf %5, %10 : vector<2x41xf32>
    %c0_7 = arith.constant 0 : index
    %c0_8 = arith.constant 0 : index
    %12 = vector.load %arg5[%c0_7, %c0_8] : memref<2x41xf32, #tpu.memory_space<vmem>>, vector<2x41xf32>
    tpu.vector_store %arg5[%c0_7, %c0_8], %11 {strides = array<i32>} : memref<2x41xf32, #tpu.memory_space<vmem>>, vector<2x41xf32>,
    %c0_i32_9 = arith.constant 0 : i32
    %13 = arith.cmpi eq, %arg1, %c0_i32_9 : i32
    %14 = arith.extui %13 : i1 to i32
    %c0_i32_10 = arith.constant 0 : i32
    %15 = arith.cmpi ne, %14, %c0_i32_10 : i32
    scf.if %15 {
      %c0_11 = arith.constant 0 : index
      %c0_12 = arith.constant 0 : index
      %16 = vector.load %arg5[%c0_11, %c0_12] : memref<2x41xf32, #tpu.memory_space<vmem>>, vector<2x41xf32>
      %cst_13 = arith.constant 3.906250e-03 : f32
      %17 = vector.broadcast %cst_13 : f32 to vector<2x41xf32>
      %18 = arith.mulf %16, %17 : vector<2x41xf32>
      %19 = math.log %18 : vector<2x41xf32>
      %20 = vector.broadcast %4 : vector<1x41xf32> to vector<2x41xf32>
      %21 = arith.divf %19, %20 : vector<2x41xf32>
      %c0_14 = arith.constant 0 : index
      %c0_15 = arith.constant 0 : index
      %22 = vector.load %arg4[%c0_14, %c0_15] : memref<2x41xf32, #tpu.memory_space<vmem>>, vector<2x41xf32>
      tpu.vector_store %arg4[%c0_14, %c0_15], %21 {strides = array<i32>} : memref<2x41xf32, #tpu.memory_space<vmem>>, vector<2x41xf32>,
    } else {
    }
    return
  }
  func.func @transform_0(%arg0: i32, %arg1: i32) -> (i32, i32, i32) {
    %c0_i32 = arith.constant 0 : i32
    %c0_i32_0 = arith.constant 0 : i32
    return %arg0, %c0_i32, %arg1 : i32, i32, i32
  }
  func.func @transform_1(%arg0: i32, %arg1: i32) -> (i32, i32) {
    %c0_i32 = arith.constant 0 : i32
    %c0_i32_0 = arith.constant 0 : i32
    %c0_i32_1 = arith.constant 0 : i32
    return %c0_i32, %c0_i32_0 : i32, i32
  }
  func.func @transform_2(%arg0: i32, %arg1: i32) -> (i32, i32) {
    %c0_i32 = arith.constant 0 : i32
    %c0_i32_0 = arith.constant 0 : i32
    return %arg0, %c0_i32 : i32, i32
  }
}

</mosaic_0001>

<llo_original>
// kernel: mex_forward.1
$region0: #{mex_forward.1}
  #allocation0 [shape = 'u32[]', space=smem, size = 0x4, offset = 0x4, fixed_abs, tag = 'smem constant byte address 0x4 - core index']
  #allocation1 [shape = 'u32[72,128]{1,0:T(1,128)}', space=vmem, size = 0x9000, scoped, tag = 'internal scratch']
  #allocation2 [shape = 'f32[2,41]{1,0:T(2,128)}', space=vmem, size = 0x400, scoped, tag = 'scratch operand']
  %s0 = inlined_call_operand.vmem [shape: f32[2,41,256], index: 0, kind: input, shape index: {}]
  %s1 = inlined_call_operand.vmem [shape: f32[1,41], index: 1, kind: input, shape index: {}]
  %s2 = inlined_call_operand.hbm [shape: f32[2,41], index: 2, kind: output, shape index: {}]
  %s3 = sld [smem:[#allocation0]]
  $region26: #{mex_forward.1} parent=0
    _
  %s5 = ssub.s32 1, %s3
  %s6 = scalar_select 0, %s5, %s3
  $region1: #{mex_forward.1} parent=0
    #allocation3 [shape = 'u8[1024]{0}', space=vmem, size = 0x400, scoped, tag = 'output window, operand 0, single buffered']
    #allocation4 [shape = 's32[1]{0}', space=sflag, size = 0x4, scoped, tag = 'scoped memory for mex_forward.1']
    %7 = vsyncpa [#allocation4], 0
    // Predicated region
    $region2: #{mex_forward.1} parent=1 // pred_check
      _
    $region3: #{mex_forward.1} parent=1 // pred_check_branch
      %9 = sbr.rel (0) target = $region5
    $region4: #{mex_forward.1} parent=1 // pred_region
      _
    $region5: #{mex_forward.1} parent=1 // pred_fallthru
      _
    // Predicated region
    $region6: #{mex_forward.1} parent=1 // pred_check
      _
    $region7: #{mex_forward.1} parent=1 // pred_check_branch
      %11 = sbr.rel (0) target = $region9
    $region8: #{mex_forward.1} parent=1 // pred_region
      _
    $region9: #{mex_forward.1} parent=1 // pred_fallthru
      _
    %p12 = scmp.eq.s32.totalorder 0, 0
    // Predicated region
    $region10: #{mex_forward.1} parent=1 // pred_check
      %p13 = pneg %p12
    $region11: #{mex_forward.1} parent=1 // pred_check_branch
      %15 = sbr.rel (%p13) target = $region13
    $region12: #{mex_forward.1} parent=1 // pred_region
      %vm16 = vcmask 328704
      %17 = vst.msk [vmem:[#allocation2] sm:$0x3] %vm16, 0.0
    $region13: #{mex_forward.1} parent=1 // pred_fallthru
      _
    %v18 = vld [vmem:[%s0] sm:$0xff]
    %v19 = vld [vmem:[%s0 + $0x8] sm:$0xff]
    %v20 = vld [vmem:[%s0 + $0x10] sm:$0xff]
    %v21 = vld [vmem:[%s0 + $0x18] sm:$0xff]
    %v22 = vld [vmem:[%s0 + $0x20] sm:$0xff]
    %v23 = vld [vmem:[%s0 + $0x28] sm:$0xff]
    %v24 = vld [vmem:[%s0 + $0x30] sm:$0xff]
    %v25 = vld [vmem:[%s0 + $0x38] sm:$0xff]
    %v26 = vld [vmem:[%s0 + $0x40] sm:$0xff]
    %v27 = vld [vmem:[%s0 + $0x48] sm:$0xff]
    %v28 = vld [vmem:[%s0 + $0x50] sm:$0x1]
    %v29 = vld [vmem:[%s0 + $0x58] sm:$0x1]
    %v30 = vld [vmem:[%s0 + $0x60] sm:$0xff]
    %v31 = vld [vmem:[%s0 + $0x68] sm:$0xff]
    %v32 = vld [vmem:[%s0 + $0x70] sm:$0xff]
    %v33 = vld [vmem:[%s0 + $0x78] sm:$0xff]
    %v34 = vld [vmem:[%s0 + $0x80] sm:$0xff]
    %v35 = vld [vmem:[%s0 + $0x88] sm:$0xff]
    %v36 = vld [vmem:[%s0 + $0x90] sm:$0xff]
    %v37 = vld [vmem:[%s0 + $0x98] sm:$0xff]
    %v38 = vld [vmem:[%s0 + $0xa0] sm:$0xff]
    %v39 = vld [vmem:[%s0 + $0xa8] sm:$0xff]
    %v40 = vld [vmem:[%s0 + $0xb0] sm:$0x1]
    %v41 = vld [vmem:[%s0 + $0xb8] sm:$0x1]
    %v42 = vld [vmem:[%s1] sm:$0x1]
    %v43 = vld [vmem:[#allocation2] sm:$0x3]
    %v44 = vperm.slane %v42, 0
    %v45 = vlaneseq
    %v46 = vshrl.u32 %v45, 7
    %48 = vset.pattern.permute.xlu0 %v46
    %49 = vperm.xlu0 %48, %v44
    %v50 = vpop.permute.xlu0 %49
    %v51 = vlaneseq
    %v52 = vshrl.u32 %v51, 7
    %v53 = vadd.s32 %v52, 8
    %54 = vset.pattern.permute.xlu0 %v53
    %55 = vperm.xlu0 %54, %v44
    %v56 = vpop.permute.xlu0 %55
    %v57 = vlaneseq
    %v58 = vshrl.u32 %v57, 7
    %v59 = vadd.s32 %v58, 16
    %60 = vset.pattern.permute.xlu0 %v59
    %61 = vperm.xlu0 %60, %v44
    %v62 = vpop.permute.xlu0 %61
    %v63 = vlaneseq
    %v64 = vshrl.u32 %v63, 7
    %v65 = vadd.s32 %v64, 24
    %66 = vset.pattern.permute.xlu0 %v65
    %67 = vperm.xlu0 %66, %v44
    %v68 = vpop.permute.xlu0 %67
    %v69 = vlaneseq
    %v70 = vshrl.u32 %v69, 7
    %v71 = vadd.s32 %v70, 32
    %72 = vset.pattern.permute.xlu0 %v71
    %73 = vperm.xlu0 %72, %v44
    %v74 = vpop.permute.xlu0 %73
    %v75 = vlaneseq
    %v76 = vshrl.u32 %v75, 7
    %v77 = vadd.s32 %v76, 40
    %78 = vset.pattern.permute.xlu0 %v77
    %79 = vperm.xlu0 %78, %v44
    %v80 = vpop.permute.xlu0 %79
    %v81 = vmul.f32 %v50, %v18
    %v82 = vmul.f32 %v50, %v19
    %v83 = vmul.f32 %v56, %v20
    %v84 = vmul.f32 %v56, %v21
    %v85 = vmul.f32 %v62, %v22
    %v86 = vmul.f32 %v62, %v23
    %v87 = vmul.f32 %v68, %v24
    %v88 = vmul.f32 %v68, %v25
    %v89 = vmul.f32 %v74, %v26
    %v90 = vmul.f32 %v74, %v27
    %v91 = vmul.f32 %v80, %v28
    %v92 = vmul.f32 %v80, %v29
    %v93 = vmul.f32 %v50, %v30
    %v94 = vmul.f32 %v50, %v31
    %v95 = vmul.f32 %v56, %v32
    %v96 = vmul.f32 %v56, %v33
    %v97 = vmul.f32 %v62, %v34
    %v98 = vmul.f32 %v62, %v35
    %v99 = vmul.f32 %v68, %v36
    %v100 = vmul.f32 %v68, %v37
    %v101 = vmul.f32 %v74, %v38
    %v102 = vmul.f32 %v74, %v39
    %v103 = vmul.f32 %v80, %v40
    %v104 = vmul.f32 %v80, %v41
    %v105 = vmul.f32 %v81, 1.442695
    %v106 = vpow.pop %v105
    %v107 = vmul.f32 %v82, 1.442695
    %v108 = vpow.pop %v107
    %v109 = vmul.f32 %v83, 1.442695
    %v110 = vpow.pop %v109
    %v111 = vmul.f32 %v84, 1.442695
    %v112 = vpow.pop %v111
    %v113 = vmul.f32 %v85, 1.442695
    %v114 = vpow.pop %v113
    %v115 = vmul.f32 %v86, 1.442695
    %v116 = vpow.pop %v115
    %v117 = vmul.f32 %v87, 1.442695
    %v118 = vpow.pop %v117
    %v119 = vmul.f32 %v88, 1.442695
    %v120 = vpow.pop %v119
    %v121 = vmul.f32 %v89, 1.442695
    %v122 = vpow.pop %v121
    %v123 = vmul.f32 %v90, 1.442695
    %v124 = vpow.pop %v123
    %v125 = vmul.f32 %v91, 1.442695
    %v126 = vpow.pop %v125
    %v127 = vmul.f32 %v92, 1.442695
    %v128 = vpow.pop %v127
    %v129 = vmul.f32 %v93, 1.442695
    %v130 = vpow.pop %v129
    %v131 = vmul.f32 %v94, 1.442695
    %v132 = vpow.pop %v131
    %v133 = vmul.f32 %v95, 1.442695
    %v134 = vpow.pop %v133
    %v135 = vmul.f32 %v96, 1.442695
    %v136 = vpow.pop %v135
    %v137 = vmul.f32 %v97, 1.442695
    %v138 = vpow.pop %v137
    %v139 = vmul.f32 %v98, 1.442695
    %v140 = vpow.pop %v139
    %v141 = vmul.f32 %v99, 1.442695
    %v142 = vpow.pop %v141
    %v143 = vmul.f32 %v100, 1.442695
    %v144 = vpow.pop %v143
    %v145 = vmul.f32 %v101, 1.442695
    %v146 = vpow.pop %v145
    %v147 = vmul.f32 %v102, 1.442695
    %v148 = vpow.pop %v147
    %v149 = vmul.f32 %v103, 1.442695
    %v150 = vpow.pop %v149
    %v151 = vmul.f32 %v104, 1.442695
    %v152 = vpow.pop %v151
    %v153 = vadd.f32 %v106, %v108
    %154 = vadd.xlane.f32.xlu0 %v153
    %v155 = vpop.xlane.xlu0 %154
    %v156 = vadd.f32 %v110, %v112
    %157 = vadd.xlane.f32.xlu0 %v156
    %v158 = vpop.xlane.xlu0 %157
    %v159 = vadd.f32 %v114, %v116
    %160 = vadd.xlane.f32.xlu0 %v159
    %v161 = vpop.xlane.xlu0 %160
    %v162 = vadd.f32 %v118, %v120
    %163 = vadd.xlane.f32.xlu0 %v162
    %v164 = vpop.xlane.xlu0 %163
    %v165 = vadd.f32 %v122, %v124
    %166 = vadd.xlane.f32.xlu0 %v165
    %v167 = vpop.xlane.xlu0 %166
    %vm168 = vcmask 1040384
    %v169 = vsel %vm168, %v126, 0.0
    %v170 = vsel %vm168, %v128, 0.0
    %v171 = vadd.f32 %v169, %v170
    %172 = vadd.xlane.f32.xlu0 %v171
    %v173 = vpop.xlane.xlu0 %172
    %v174 = vadd.f32 %v130, %v132
    %175 = vadd.xlane.f32.xlu0 %v174
    %v176 = vpop.xlane.xlu0 %175
    %v177 = vadd.f32 %v134, %v136
    %178 = vadd.xlane.f32.xlu0 %v177
    %v179 = vpop.xlane.xlu0 %178
    %v180 = vadd.f32 %v138, %v140
    %181 = vadd.xlane.f32.xlu0 %v180
    %v182 = vpop.xlane.xlu0 %181
    %v183 = vadd.f32 %v142, %v144
    %184 = vadd.xlane.f32.xlu0 %v183
    %v185 = vpop.xlane.xlu0 %184
    %v186 = vadd.f32 %v146, %v148
    %187 = vadd.xlane.f32.xlu0 %v186
    %v188 = vpop.xlane.xlu0 %187
    %v189 = vsel %vm168, %v150, 0.0
    %v190 = vsel %vm168, %v152, 0.0
    %v191 = vadd.f32 %v189, %v190
    %192 = vadd.xlane.f32.xlu0 %v191
    %v193 = vpop.xlane.xlu0 %192
    %v206 = vlaneseq
    %v207 = vand.u32 %v206, 127
    %v208 = vperm.slane %v155, %v207
    %v209 = vadd.s32 %v207, 4294967288
    %v210 = vperm.slane %v158, %v209
    %vm211 = vcmask 130112
    %v212 = vsel %vm211, %v210, %v208
    %v213 = vadd.s32 %v207, 4294967280
    %v214 = vperm.slane %v161, %v213
    %vm215 = vcmask 195712
    %v216 = vsel %vm215, %v214, %v212
    %v217 = vadd.s32 %v207, 4294967272
    %v218 = vperm.slane %v164, %v217
    %vm219 = vcmask 261312
    %v220 = vsel %vm219, %v218, %v216
    %v221 = vadd.s32 %v207, 4294967264
    %v222 = vperm.slane %v167, %v221
    %vm223 = vcmask 326912
    %v224 = vsel %vm223, %v222, %v220
    %v225 = vadd.s32 %v207, 4294967256
    %v226 = vperm.slane %v173, %v225
    %vm227 = vcmask 392512
    %v228 = vsel %vm227, %v226, %v224
    %v229 = vperm.slane %v176, %v207
    %v230 = vperm.slane %v179, %v209
    %v231 = vsel %vm211, %v230, %v229
    %v232 = vperm.slane %v182, %v213
    %v233 = vsel %vm215, %v232, %v231
    %v234 = vperm.slane %v185, %v217
    %v235 = vsel %vm219, %v234, %v233
    %v236 = vperm.slane %v188, %v221
    %v237 = vsel %vm223, %v236, %v235
    %v238 = vperm.slane %v193, %v225
    %v239 = vsel %vm227, %v238, %v237
    %vm240 = vcmask 1041409
    %v241 = vsel %vm240, %v239, %v228
    %v243 = vadd.f32 %v43, %v241
    %vm244 = vcmask 328704
    %245 = vst.msk [vmem:[#allocation2] sm:$0x3] %vm244, %v243
    // Predicated region
    $region14: #{mex_forward.1} parent=1 // pred_check
      %p246 = pneg %p12
    $region15: #{mex_forward.1} parent=1 // pred_check_branch
      %248 = sbr.rel (%p246) target = $region17
    $region16: #{mex_forward.1} parent=1 // pred_region
      %v249 = vld [vmem:[#allocation2] sm:$0x3]
      %v250 = vmul.f32 %v249, 0.00390625
      %v251 = vlog2.pop %v250
      %v252 = vmul.f32 %v251, 0.6931472
      %v254 = vperm.slane %v42, 0
      %v256 = vrcp.pop %v254
      %v257 = vmul.f32 %v254, %v256
      %v258 = vsub.f32 1.0, %v257
      %v259 = vmul.f32 %v256, %v258
      %v260 = vadd.f32 %v256, %v259
      %vm261 = vweird.f32 %v254
      %vm262 = vweird.f32 %v256
      %vm263 = vmor %vm261, %vm262
      %v264 = vsel %vm263, %v256, %v260
      %v265 = vand.u32 2147483647, %v254
      %vm266 = vcmp.eq.f32.partialorder %v265, 8.507059e+37
      %v267 = vand.u32 %v254, 2147483648
      %v268 = vor.u32 1.1754944e-38, %v267
      %v269 = vsel %vm266, %v268, %v264
      %v270 = vmul.f32 %v252, %v269
      %271 = vst.msk [vmem:[#allocation3] sm:$0x3] %vm244, %v270
    $region17: #{mex_forward.1} parent=1 // pred_fallthru
      _
    // Predicated region
    $region18: #{mex_forward.1} parent=1 // pred_check
      _
    $region19: #{mex_forward.1} parent=1 // pred_check_branch
      %273 = sbr.rel (0) target = $region21
    $region20: #{mex_forward.1} parent=1 // pred_region
      %275 = vsyncadd [#allocation4], 0
      %s277 = sshll.u32 [#allocation3], 4
      %s278 = int_to_ptr.vmem [resolvable:$true] %s277
      %s279 = sshll.u32 %s2, 4
      %s280 = int_to_ptr.hbm [resolvable:$true] %s279
      %282 = dma.vmem_to_hbm [thread:$0]  %s278, 32, %s280, [#allocation4]
    $region21: #{mex_forward.1} parent=1 // pred_fallthru
      _
    // Predicated region
    $region22: #{mex_forward.1} parent=1 // pred_check
      _
    $region23: #{mex_forward.1} parent=1 // pred_check_branch
      %284 = sbr.rel (0) target = $region25
    $region24: #{mex_forward.1} parent=1 // pred_region
      %286 = dma.done [#allocation4], 32
    $region25: #{mex_forward.1} parent=1 // pred_fallthru
      _
    %287 = vsyncpa [#allocation4], 1

</llo_original>
